<compile_context>
chip_gen: v7x
topology: tpu7x:2x2x1
jax: 0.10.0
libtpu: 0.0.40
codegen_flags: <defaults>
</compile_context>

<pallas_src>
import functools

import numpy as np
import jax
import jax.numpy as jnp
from jax.experimental import pallas as pl
from jax.experimental.pallas import tpu as pltpu


def make_banded_weights(w, width, cin_pad=None):
    """(3, 3, Cin, Cout) conv weights -> (3*W*Cin_pad, W*Cout) banded matrix.

    The K axis is the concatenation [dy=0 | dy=1 | dy=2] (kernel rows), each
    block spanning W*Cin_pad.  Within a dy block,
        wb[wi*Cin_pad + c, wo*Cout + o] = w[dy, dx, c, o],  wi = wo + dx - 1,
    zero whenever wi falls outside [0, W) (the conv's width zero-padding) or
    c >= Cin (lane-padding channels).
    """
    w = np.asarray(w)
    _, _, cin, cout = w.shape
    if cin_pad is None:
        cin_pad = cin
    wb = np.zeros((3, width * cin_pad, width * cout), w.dtype)
    for wo in range(width):
        for dx in range(3):
            wi = wo + dx - 1
            if 0 <= wi < width:
                wb[:, wi * cin_pad:wi * cin_pad + cin,
                   wo * cout:(wo + 1) * cout] = w[:, dx]
    return jnp.asarray(wb.reshape(3 * width * cin_pad, width * cout))


def _pad_channels(cin, width, lane=128):
    """Smallest cin_pad >= cin making width*cin_pad lane-aligned (if cheap)."""
    wc = width * cin
    wc_pad = -(-wc // lane) * lane
    if wc_pad % width == 0 and wc_pad // width <= 2 * cin:
        return wc_pad // width
    return cin


def _pick_batch_tile(n, h, target_rows=256, max_rows=512):
    """Largest divisor of n with b*h <= max_rows, stopping once b*h fills the
    256-row v6e/v7x MXU; keeps several grid steps per core at larger N."""
    best = 1
    for b in range(1, n + 1):
        if n % b:
            continue
        if b * h <= max_rows:
            best = b
        if b * h >= target_rows:
            break
    return best


def spec_cnn_kernel(x_ref, w1_ref, b1_ref, w2_ref, b2_ref, o_ref, *, img_h):
    """Fused conv3x3+ReLU -> conv3x3+ReLU for a tile of B_TILE whole images.

    x_ref : (B_TILE*H, W*Cin_pad)  images stacked on sublanes, lane-dense rows
    w1_ref: (3*W*Cin_pad, W*C)     banded weights, dy concatenated onto K
    b1_ref: (1, W*C)               bias tiled across width
    w2_ref: (3*W*C, W*C)
    b2_ref: (1, W*C)
    o_ref : (B_TILE*H, W*C)
    """

    def conv3x3_relu(v, w_ref, b_ref):
        m = v.shape[0]
        # Row index of each sublane within its image.  The masks zero the dy
        # taps that would read across a top/bottom image boundary (and the
        # roll wrap-around) — i.e. they implement the conv's height padding.
        r = jax.lax.broadcasted_iota(jnp.int32, v.shape, 0) % img_h
        row_above = jnp.where(r != 0, pltpu.roll(v, 1, 0), 0.0)
        row_below = jnp.where(r != img_h - 1, pltpu.roll(v, m - 1, 0), 0.0)
        # [above | centre | below] on lanes -> ONE MXU matmul with K = 3*W*Cin;
        # all accumulation happens inside the MXU accumulator.
        win = jnp.concatenate([row_above, v, row_below], axis=-1)
        acc = jnp.dot(win, w_ref[...], preferred_element_type=jnp.float32)
        return jnp.maximum(acc + b_ref[...], 0.0)

    h1 = conv3x3_relu(x_ref[...], w1_ref, b1_ref)      # layer 1; stays on-chip
    o_ref[...] = conv3x3_relu(h1, w2_ref, b2_ref).astype(o_ref.dtype)


def spec_cnn_forward(x_hr_nchw, w1b, b1t, w2b, b2t, n_bands, cin_pad):
    """x_hr_nchw: (N, Cin, H, W) -> (N, C, H, W) through the fused kernel."""
    N, Cin, H, W = x_hr_nchw.shape
    C = n_bands
    b_tile = _pick_batch_tile(N, H)

    # NCHW -> NHWC, zero-pad channels so the lane axis is dense, then flatten
    # width*channels onto lanes and batch*height onto sublanes.
    x = jnp.transpose(x_hr_nchw, (0, 2, 3, 1))
    if cin_pad != Cin:
        x = jnp.pad(x, ((0, 0), (0, 0), (0, 0), (0, cin_pad - Cin)))
    x = x.reshape(N * H, W * cin_pad)

    out = pl.pallas_call(
        functools.partial(spec_cnn_kernel, img_h=H),
        out_shape=jax.ShapeDtypeStruct((N * H, W * C), x.dtype),
        grid=(N // b_tile,),
        in_specs=[
            pl.BlockSpec((b_tile * H, W * cin_pad), lambda n: (n, 0)),
            pl.BlockSpec((3 * W * cin_pad, W * C), lambda n: (0, 0)),
            pl.BlockSpec((1, W * C), lambda n: (0, 0)),
            pl.BlockSpec((3 * W * C, W * C), lambda n: (0, 0)),
            pl.BlockSpec((1, W * C), lambda n: (0, 0)),
        ],
        out_specs=pl.BlockSpec((b_tile * H, W * C), lambda n: (n, 0)),
        compiler_params=pltpu.CompilerParams(
            dimension_semantics=("parallel",)),
    )(x, w1b, b1t, w2b, b2t)

    # (N*H, W*C) -> (N, H, W, C) -> NCHW.
    # TODO(synk): if the consumer can take NHWC / (N, H, W*C) directly, drop
    #             these wrapper transposes (two full HBM passes at scale).
    return jnp.transpose(out.reshape(N, H, W, C), (0, 3, 1, 2))


class SpecCNNPallas:
    """JAX/Pallas port of SpecCNN. Parameters initialized like nn.Conv2d."""

    def __init__(self, scale_ratio, n_select_bands, n_bands, key):
        self.scale_ratio = scale_ratio
        self.n_bands = n_bands
        self.n_select_bands = n_select_bands

        k1, k2, k3, k4 = jax.random.split(key, 4)

        # PyTorch conv weights are (Cout, Cin, 3, 3); stored here as (3, 3, Cin, Cout).
        def init_conv(kw, kb, cin, cout):
            fan_in = cin * 3 * 3
            bound = 1.0 / np.sqrt(fan_in)
            w = jax.random.uniform(kw, (cout, cin, 3, 3), jnp.float32, -bound, bound)
            b = jax.random.uniform(kb, (cout,), jnp.float32, -bound, bound)
            return jnp.transpose(w, (2, 3, 1, 0)), b

        self.w1, self.b1 = init_conv(k1, k2, n_select_bands, n_bands)
        self.w2, self.b2 = init_conv(k3, k4, n_bands, n_bands)
        self._packed_cache = {}  # keyed by image width

    def _packed_params(self, width):
        if width not in self._packed_cache:
            cin_pad = _pad_channels(self.n_select_bands, width)
            self._packed_cache[width] = (
                cin_pad,
                make_banded_weights(self.w1, width, cin_pad),
                jnp.tile(self.b1, width).reshape(1, -1),
                make_banded_weights(self.w2, width),
                jnp.tile(self.b2, width).reshape(1, -1),
            )
        return self._packed_cache[width]

    def __call__(self, x_lr, x_hr):
        # x_hr is NCHW (PyTorch convention); x_lr is unused by the forward pass.
        _, _, _, W = x_hr.shape
        cin_pad, w1b, b1t, w2b, b2t = self._packed_params(W)
        x = spec_cnn_forward(x_hr, w1b, b1t, w2b, b2t, self.n_bands, cin_pad)
        return (x, 0, 0, 0, 0, 0)


def _reference(model, x_hr):
    """Pure-JAX reference (lax.conv) for correctness checking."""
    x = x_hr
    for (w, b) in ((model.w1, model.b1), (model.w2, model.b2)):
        w_oihw = jnp.transpose(w, (3, 2, 0, 1))  # (3,3,Cin,Cout) -> (Cout,Cin,3,3)
        x = jax.lax.conv_general_dilated(
            x, w_oihw, window_strides=(1, 1), padding=((1, 1), (1, 1)),
            dimension_numbers=("NCHW", "OIHW", "NCHW"),
        )
        x = jnp.maximum(x + b.reshape(1, -1, 1, 1), 0.0)
    return x


if __name__ == "__main__":
    key = jax.random.PRNGKey(0)
    k_param, k_lr, k_hr = jax.random.split(key, 3)

    scale_ratio = 2
    n_select_bands = 4
    n_bands = 8
    N, H, W = 2, 16, 16

    model = SpecCNNPallas(scale_ratio, n_select_bands, n_bands, k_param)

    # NCHW inputs, matching the PyTorch module's convention.
    x_hr = jax.random.normal(k_hr, (N, n_select_bands, H, W), jnp.float32)
    x_lr = jax.random.normal(
        k_lr, (N, n_bands, H // scale_ratio, W // scale_ratio), jnp.float32
    )

    out = model(x_lr, x_hr)
    x_out = jax.block_until_ready(out[0])
    assert x_out.shape == (N, n_bands, H, W)
    assert out[1:] == (0, 0, 0, 0, 0)

    ref = jax.block_until_ready(_reference(model, x_hr))
    assert jnp.allclose(x_out, ref, atol=1e-4, rtol=1e-4)

    print("KERNEL_OK")
</pallas_src>

<mosaic_0001>
module attributes {stable_mosaic.version = 11 : i64} {
  func.func @spec_cnn_kernel(%arg0: i32, %arg1: memref<32x128xf32, #tpu.memory_space<vmem>>, %arg2: memref<384x128xf32, #tpu.memory_space<vmem>>, %arg3: memref<1x128xf32, #tpu.memory_space<vmem>>, %arg4: memref<384x128xf32, #tpu.memory_space<vmem>>, %arg5: memref<1x128xf32, #tpu.memory_space<vmem>>, %arg6: memref<32x128xf32, #tpu.memory_space<vmem>>) attributes {dimension_semantics = [#tpu.dimension_semantics<parallel>], iteration_bounds = array<i64: 1>, scalar_prefetch = 0 : i64, scratch_operands = 0 : i64, tpu.core_type = #tpu.core_type<tc>, window_params = [{transform_indices = @transform_0, window_bounds = array<i64: 32, 128>}, {pipeline_mode = #tpu.pipeline_mode<synchronous>, transform_indices = @transform_1, window_bounds = array<i64: 384, 128>}, {pipeline_mode = #tpu.pipeline_mode<synchronous>, transform_indices = @transform_2, window_bounds = array<i64: 1, 128>}, {pipeline_mode = #tpu.pipeline_mode<synchronous>, transform_indices = @transform_3, window_bounds = array<i64: 384, 128>}, {pipeline_mode = #tpu.pipeline_mode<synchronous>, transform_indices = @transform_4, window_bounds = array<i64: 1, 128>}, {transform_indices = @transform_5, window_bounds = array<i64: 32, 128>}]} {
    %c0 = arith.constant 0 : index
    %c0_0 = arith.constant 0 : index
    %0 = vector.load %arg1[%c0, %c0_0] : memref<32x128xf32, #tpu.memory_space<vmem>>, vector<32x128xf32>
    %1 = tpu.iota {dimensions = array<i32: 0>} : vector<32x128xi32>
    %c16_i32 = arith.constant 16 : i32
    %c0_i32 = arith.constant 0 : i32
    %2 = arith.cmpi eq, %c16_i32, %c0_i32 : i32
    %c1_i32 = arith.constant 1 : i32
    %3 = arith.select %2, %c1_i32, %c16_i32 : i32
    %4 = vector.broadcast %3 : i32 to vector<32x128xi32>
    %5 = arith.remsi %1, %4 : vector<32x128xi32>
    %c0_i32_1 = arith.constant 0 : i32
    %6 = vector.broadcast %c0_i32_1 : i32 to vector<32x128xi32>
    %7 = arith.cmpi ne, %5, %6 : vector<32x128xi32>
    %c0_i32_2 = arith.constant 0 : i32
    %8 = vector.broadcast %c0_i32_2 : i32 to vector<32x128xi32>
    %9 = arith.cmpi slt, %5, %8 : vector<32x128xi32>
    %c0_i32_3 = arith.constant 0 : i32
    %10 = arith.cmpi slt, %3, %c0_i32_3 : i32
    %11 = vector.broadcast %10 : i1 to vector<32x128xi1>
    %12 = vector.broadcast %11 : vector<32x128xi1> to vector<32x128xi1>
    %13 = arith.xori %9, %12 : vector<32x128xi1>
    %14 = arith.andi %13, %7 : vector<32x128xi1>
    %15 = vector.broadcast %3 : i32 to vector<32x128xi32>
    %16 = arith.addi %5, %15 : vector<32x128xi32>
    %17 = arith.select %14, %16, %5 : vector<32x128xi1>, vector<32x128xi32>
    %c0_i32_4 = arith.constant 0 : i32
    %18 = vector.broadcast %c0_i32_4 : i32 to vector<32x128xi32>
    %19 = arith.cmpi ne, %17, %18 : vector<32x128xi32>
    %c1_i32_5 = arith.constant 1 : i32
    %20 = tpu.dynamic_rotate %0 by %c1_i32_5 dim 0 : vector<32x128xf32>, i32 -> vector<32x128xf32>
    %cst = arith.constant 0.000000e+00 : f32
    %21 = vector.broadcast %cst : f32 to vector<32x128xf32>
    %22 = arith.select %19, %20, %21 : vector<32x128xi1>, vector<32x128xf32>
    %c15_i32 = arith.constant 15 : i32
    %23 = vector.broadcast %c15_i32 : i32 to vector<32x128xi32>
    %24 = arith.cmpi ne, %17, %23 : vector<32x128xi32>
    %c31_i32 = arith.constant 31 : i32
    %25 = tpu.dynamic_rotate %0 by %c31_i32 dim 0 : vector<32x128xf32>, i32 -> vector<32x128xf32>
    %cst_6 = arith.constant 0.000000e+00 : f32
    %26 = vector.broadcast %cst_6 : f32 to vector<32x128xf32>
    %27 = arith.select %24, %25, %26 : vector<32x128xi1>, vector<32x128xf32>
    %28 = tpu.concatenate %22, %0, %27 in 1 : vector<32x128xf32>, vector<32x128xf32>, vector<32x128xf32> -> vector<32x384xf32>
    %c0_7 = arith.constant 0 : index
    %c0_8 = arith.constant 0 : index
    %29 = vector.load %arg2[%c0_7, %c0_8] : memref<384x128xf32, #tpu.memory_space<vmem>>, vector<384x128xf32>
    %cst_9 = arith.constant dense<0.000000e+00> : vector<32x128xf32>
    %30 = tpu.matmul %28, %29, %cst_9 {dimension_numbers = #tpu.dot_dimension_numbers<[1], [0], [0], [1], [0, 0, 1, 1], [], []>} : vector<32x384xf32>, vector<384x128xf32>, vector<32x128xf32> -> vector<32x128xf32>
    %c0_10 = arith.constant 0 : index
    %c0_11 = arith.constant 0 : index
    %31 = vector.load %arg3[%c0_10, %c0_11] : memref<1x128xf32, #tpu.memory_space<vmem>>, vector<1x128xf32>
    %32 = vector.broadcast %31 : vector<1x128xf32> to vector<32x128xf32>
    %33 = arith.addf %30, %32 : vector<32x128xf32>
    %cst_12 = arith.constant 0.000000e+00 : f32
    %34 = vector.broadcast %cst_12 : f32 to vector<32x128xf32>
    %35 = arith.maximumf %33, %34 : vector<32x128xf32>
    %36 = tpu.iota {dimensions = array<i32: 0>} : vector<32x128xi32>
    %c16_i32_13 = arith.constant 16 : i32
    %c0_i32_14 = arith.constant 0 : i32
    %37 = arith.cmpi eq, %c16_i32_13, %c0_i32_14 : i32
    %c1_i32_15 = arith.constant 1 : i32
    %38 = arith.select %37, %c1_i32_15, %c16_i32_13 : i32
    %39 = vector.broadcast %38 : i32 to vector<32x128xi32>
    %40 = arith.remsi %36, %39 : vector<32x128xi32>
    %c0_i32_16 = arith.constant 0 : i32
    %41 = vector.broadcast %c0_i32_16 : i32 to vector<32x128xi32>
    %42 = arith.cmpi ne, %40, %41 : vector<32x128xi32>
    %c0_i32_17 = arith.constant 0 : i32
    %43 = vector.broadcast %c0_i32_17 : i32 to vector<32x128xi32>
    %44 = arith.cmpi slt, %40, %43 : vector<32x128xi32>
    %c0_i32_18 = arith.constant 0 : i32
    %45 = arith.cmpi slt, %38, %c0_i32_18 : i32
    %46 = vector.broadcast %45 : i1 to vector<32x128xi1>
    %47 = vector.broadcast %46 : vector<32x128xi1> to vector<32x128xi1>
    %48 = arith.xori %44, %47 : vector<32x128xi1>
    %49 = arith.andi %48, %42 : vector<32x128xi1>
    %50 = vector.broadcast %38 : i32 to vector<32x128xi32>
    %51 = arith.addi %40, %50 : vector<32x128xi32>
    %52 = arith.select %49, %51, %40 : vector<32x128xi1>, vector<32x128xi32>
    %c0_i32_19 = arith.constant 0 : i32
    %53 = vector.broadcast %c0_i32_19 : i32 to vector<32x128xi32>
    %54 = arith.cmpi ne, %52, %53 : vector<32x128xi32>
    %c1_i32_20 = arith.constant 1 : i32
    %55 = tpu.dynamic_rotate %35 by %c1_i32_20 dim 0 : vector<32x128xf32>, i32 -> vector<32x128xf32>
    %cst_21 = arith.constant 0.000000e+00 : f32
    %56 = vector.broadcast %cst_21 : f32 to vector<32x128xf32>
    %57 = arith.select %54, %55, %56 : vector<32x128xi1>, vector<32x128xf32>
    %c15_i32_22 = arith.constant 15 : i32
    %58 = vector.broadcast %c15_i32_22 : i32 to vector<32x128xi32>
    %59 = arith.cmpi ne, %52, %58 : vector<32x128xi32>
    %c31_i32_23 = arith.constant 31 : i32
    %60 = tpu.dynamic_rotate %35 by %c31_i32_23 dim 0 : vector<32x128xf32>, i32 -> vector<32x128xf32>
    %cst_24 = arith.constant 0.000000e+00 : f32
    %61 = vector.broadcast %cst_24 : f32 to vector<32x128xf32>
    %62 = arith.select %59, %60, %61 : vector<32x128xi1>, vector<32x128xf32>
    %63 = tpu.concatenate %57, %35, %62 in 1 : vector<32x128xf32>, vector<32x128xf32>, vector<32x128xf32> -> vector<32x384xf32>
    %c0_25 = arith.constant 0 : index
    %c0_26 = arith.constant 0 : index
    %64 = vector.load %arg4[%c0_25, %c0_26] : memref<384x128xf32, #tpu.memory_space<vmem>>, vector<384x128xf32>
    %cst_27 = arith.constant dense<0.000000e+00> : vector<32x128xf32>
    %65 = tpu.matmul %63, %64, %cst_27 {dimension_numbers = #tpu.dot_dimension_numbers<[1], [0], [0], [1], [0, 0, 1, 1], [], []>} : vector<32x384xf32>, vector<384x128xf32>, vector<32x128xf32> -> vector<32x128xf32>
    %c0_28 = arith.constant 0 : index
    %c0_29 = arith.constant 0 : index
    %66 = vector.load %arg5[%c0_28, %c0_29] : memref<1x128xf32, #tpu.memory_space<vmem>>, vector<1x128xf32>
    %67 = vector.broadcast %66 : vector<1x128xf32> to vector<32x128xf32>
    %68 = arith.addf %65, %67 : vector<32x128xf32>
    %cst_30 = arith.constant 0.000000e+00 : f32
    %69 = vector.broadcast %cst_30 : f32 to vector<32x128xf32>
    %70 = arith.maximumf %68, %69 : vector<32x128xf32>
    %c0_31 = arith.constant 0 : index
    %c0_32 = arith.constant 0 : index
    %71 = vector.load %arg6[%c0_31, %c0_32] : memref<32x128xf32, #tpu.memory_space<vmem>>, vector<32x128xf32>
    tpu.vector_store %arg6[%c0_31, %c0_32], %70 {strides = array<i32>} : memref<32x128xf32, #tpu.memory_space<vmem>>, vector<32x128xf32>,
    return
  }
  func.func @transform_0(%arg0: i32) -> (i32, i32) {
    %c0_i32 = arith.constant 0 : i32
    %c0_i32_0 = arith.constant 0 : i32
    return %arg0, %c0_i32 : i32, i32
  }
  func.func @transform_1(%arg0: i32) -> (i32, i32) {
    %c0_i32 = arith.constant 0 : i32
    %c0_i32_0 = arith.constant 0 : i32
    %c0_i32_1 = arith.constant 0 : i32
    return %c0_i32, %c0_i32_0 : i32, i32
  }
  func.func @transform_2(%arg0: i32) -> (i32, i32) {
    %c0_i32 = arith.constant 0 : i32
    %c0_i32_0 = arith.constant 0 : i32
    %c0_i32_1 = arith.constant 0 : i32
    return %c0_i32, %c0_i32_0 : i32, i32
  }
  func.func @transform_3(%arg0: i32) -> (i32, i32) {
    %c0_i32 = arith.constant 0 : i32
    %c0_i32_0 = arith.constant 0 : i32
    %c0_i32_1 = arith.constant 0 : i32
    return %c0_i32, %c0_i32_0 : i32, i32
  }
  func.func @transform_4(%arg0: i32) -> (i32, i32) {
    %c0_i32 = arith.constant 0 : i32
    %c0_i32_0 = arith.constant 0 : i32
    %c0_i32_1 = arith.constant 0 : i32
    return %c0_i32, %c0_i32_0 : i32, i32
  }
  func.func @transform_5(%arg0: i32) -> (i32, i32) {
    %c0_i32 = arith.constant 0 : i32
    %c0_i32_0 = arith.constant 0 : i32
    return %arg0, %c0_i32 : i32, i32
  }
}

</mosaic_0001>

<llo_original>
// kernel: tpu_custom_call.1
$region0: #{tpu_custom_call.1}
  #allocation0 [shape = 'u32[]', space=smem, size = 0x4, offset = 0x4, fixed_abs, tag = 'smem constant byte address 0x4 - core index']
  #allocation1 [shape = 'u32[144,128]{1,0:T(1,128)}', space=vmem, size = 0x12000, scoped, tag = 'internal scratch']
  %s0 = inlined_call_operand.hbm [shape: f32[32,128], index: 0, kind: input, shape index: {}]
  %s1 = inlined_call_operand.hbm [shape: f32[384,128], index: 1, kind: input, shape index: {}]
  %s2 = inlined_call_operand.vmem [shape: f32[1,128], index: 2, kind: input, shape index: {}]
  %s3 = inlined_call_operand.hbm [shape: f32[384,128], index: 3, kind: input, shape index: {}]
  %s4 = inlined_call_operand.vmem [shape: f32[1,128], index: 4, kind: input, shape index: {}]
  %s5 = inlined_call_operand.hbm [shape: f32[32,128], index: 5, kind: output, shape index: {}]
  %s6 = sld [smem:[#allocation0]]
  $region42: #{tpu_custom_call.1} parent=0
    _
  %s8 = ssub.s32 1, %s6
  %s9 = scalar_select 0, %s8, %s6
  $region1: #{tpu_custom_call.1} parent=0
    #allocation2 [shape = 'u8[16384]{0}', space=vmem, size = 0x4000, scoped, tag = 'input window, operand 0, single buffered']
    #allocation3 [shape = 's32[1]{0}', space=sflag, size = 0x4, scoped, tag = 'scoped memory for tpu_custom_call.1']
    #allocation4 [shape = 's32[1]{0}', space=sflag, size = 0x4, scoped, tag = 'scoped memory for tpu_custom_call.1']
    #allocation5 [shape = 'u8[196608]{0}', space=vmem, size = 0x30000, scoped, tag = 'input window, operand 1, single buffered']
    #allocation6 [shape = 's32[1]{0}', space=sflag, size = 0x4, scoped, tag = 'scoped memory for tpu_custom_call.1']
    #allocation7 [shape = 'u8[196608]{0}', space=vmem, size = 0x30000, scoped, tag = 'input window, operand 3, single buffered']
    #allocation8 [shape = 'u8[16384]{0}', space=vmem, size = 0x4000, scoped, tag = 'output window, operand 0, single buffered']
    %10 = vsyncpa [#allocation3], 0
    %11 = vsyncpa [#allocation6], 0
    %12 = vsyncpa [#allocation4], 0
    // Predicated region
    $region2: #{tpu_custom_call.1} parent=1 // pred_check
      _
    $region3: #{tpu_custom_call.1} parent=1 // pred_check_branch
      %14 = sbr.rel (0) target = $region5
    $region4: #{tpu_custom_call.1} parent=1 // pred_region
      %s16 = ssub.s32 512, 512
      %17 = vsyncadd [#allocation3], %s16
      %s18 = sshll.u32 [#allocation2], 4
      %s19 = int_to_ptr.vmem [resolvable:$true] %s18
      %24 = dma.hbm_to_vmem [thread:$0]  %s0, 512, %s19, [#allocation3], 128, 128, 8
    $region5: #{tpu_custom_call.1} parent=1 // pred_fallthru
      _
    // Predicated region
    $region6: #{tpu_custom_call.1} parent=1 // pred_check
      _
    $region7: #{tpu_custom_call.1} parent=1 // pred_check_branch
      %26 = sbr.rel (0) target = $region9
    $region8: #{tpu_custom_call.1} parent=1 // pred_region
      %s28 = ssub.s32 6144, 6144
      %29 = vsyncadd [#allocation6], %s28
      %s30 = sshll.u32 [#allocation5], 4
      %s31 = int_to_ptr.vmem [resolvable:$true] %s30
      %36 = dma.hbm_to_vmem [thread:$0]  %s1, 6144, %s31, [#allocation6], 128, 128, 8
    $region9: #{tpu_custom_call.1} parent=1 // pred_fallthru
      _
    // Predicated region
    $region10: #{tpu_custom_call.1} parent=1 // pred_check
      _
    $region11: #{tpu_custom_call.1} parent=1 // pred_check_branch
      %38 = sbr.rel (0) target = $region13
    $region12: #{tpu_custom_call.1} parent=1 // pred_region
      _
    $region13: #{tpu_custom_call.1} parent=1 // pred_fallthru
      _
    // Predicated region
    $region14: #{tpu_custom_call.1} parent=1 // pred_check
      _
    $region15: #{tpu_custom_call.1} parent=1 // pred_check_branch
      %40 = sbr.rel (0) target = $region17
    $region16: #{tpu_custom_call.1} parent=1 // pred_region
      %s42 = ssub.s32 6144, 6144
      %43 = vsyncadd [#allocation6], %s42
      %s44 = sshll.u32 [#allocation7], 4
      %s45 = int_to_ptr.vmem [resolvable:$true] %s44
      %50 = dma.hbm_to_vmem [thread:$0]  %s3, 6144, %s45, [#allocation6], 128, 128, 8
    $region17: #{tpu_custom_call.1} parent=1 // pred_fallthru
      _
    // Predicated region
    $region18: #{tpu_custom_call.1} parent=1 // pred_check
      _
    $region19: #{tpu_custom_call.1} parent=1 // pred_check_branch
      %52 = sbr.rel (0) target = $region21
    $region20: #{tpu_custom_call.1} parent=1 // pred_region
      _
    $region21: #{tpu_custom_call.1} parent=1 // pred_fallthru
      _
    // Predicated region
    $region22: #{tpu_custom_call.1} parent=1 // pred_check
      _
    $region23: #{tpu_custom_call.1} parent=1 // pred_check_branch
      %54 = sbr.rel (0) target = $region25
    $region24: #{tpu_custom_call.1} parent=1 // pred_region
      %55 = dma.done [#allocation3], 512
    $region25: #{tpu_custom_call.1} parent=1 // pred_fallthru
      _
    // Predicated region
    $region26: #{tpu_custom_call.1} parent=1 // pred_check
      _
    $region27: #{tpu_custom_call.1} parent=1 // pred_check_branch
      %57 = sbr.rel (0) target = $region29
    $region28: #{tpu_custom_call.1} parent=1 // pred_region
      %58 = dma.done [#allocation6], 6144
    $region29: #{tpu_custom_call.1} parent=1 // pred_fallthru
      _
    // Predicated region
    $region30: #{tpu_custom_call.1} parent=1 // pred_check
      _
    $region31: #{tpu_custom_call.1} parent=1 // pred_check_branch
      %60 = sbr.rel (0) target = $region33
    $region32: #{tpu_custom_call.1} parent=1 // pred_region
      %61 = dma.done [#allocation6], 6144
    $region33: #{tpu_custom_call.1} parent=1 // pred_fallthru
      _
    %v62 = vld [vmem:[#allocation2] sm:$0xff]
    %v63 = vld [vmem:[#allocation2 + $0x8] sm:$0xff]
    %v64 = vld [vmem:[#allocation2 + $0x10] sm:$0xff]
    %v65 = vld [vmem:[#allocation2 + $0x18] sm:$0xff]
    %v66 = vlaneseq
    %v67 = vshrl.u32 %v66, 7
    %v68 = vadd.s32 %v67, 8
    %v69 = vadd.s32 %v67, 16
    %v70 = vadd.s32 %v67, 24
    %vm71 = vcmp.lt.s32.totalorder %v67, 0
    %v72 = vsub.s32 0, %v67
    %v73 = vsel %vm71, %v72, %v67
    %v74 = vshrl.u32 %v73, 4
    %v75 = vand.u32 %v73, 15
    %v76 = vsub.s32 0, %v75
    %v77 = vsel %vm71, %v76, %v75
    %vm78 = vcmp.lt.s32.totalorder %v68, 0
    %v79 = vsub.s32 0, %v68
    %v80 = vsel %vm78, %v79, %v68
    %v81 = vshrl.u32 %v80, 4
    %v82 = vand.u32 %v80, 15
    %v83 = vsub.s32 0, %v82
    %v84 = vsel %vm78, %v83, %v82
    %vm85 = vcmp.lt.s32.totalorder %v69, 0
    %v86 = vsub.s32 0, %v69
    %v87 = vsel %vm85, %v86, %v69
    %v88 = vshrl.u32 %v87, 4
    %v89 = vand.u32 %v87, 15
    %v90 = vsub.s32 0, %v89
    %v91 = vsel %vm85, %v90, %v89
    %vm92 = vcmp.lt.s32.totalorder %v70, 0
    %v93 = vsub.s32 0, %v70
    %v94 = vsel %vm92, %v93, %v70
    %v95 = vshrl.u32 %v94, 4
    %v96 = vand.u32 %v94, 15
    %v97 = vsub.s32 0, %v96
    %v98 = vsel %vm92, %v97, %v96
    %vm99 = vcmp.ne.s32.totalorder %v77, 0
    %vm100 = vcmp.ne.s32.totalorder %v84, 0
    %vm101 = vcmp.ne.s32.totalorder %v91, 0
    %vm102 = vcmp.ne.s32.totalorder %v98, 0
    %vm103 = vcmp.lt.s32.totalorder %v77, 0
    %vm104 = vcmp.lt.s32.totalorder %v84, 0
    %vm105 = vcmp.lt.s32.totalorder %v91, 0
    %vm106 = vcmp.lt.s32.totalorder %v98, 0
    %vm107 = vmand %vm103, %vm99
    %vm108 = vmand %vm104, %vm100
    %vm109 = vmand %vm105, %vm101
    %vm110 = vmand %vm106, %vm102
    %v111 = vadd.s32 %v77, 16
    %v112 = vadd.s32 %v84, 16
    %v113 = vadd.s32 %v91, 16
    %v114 = vadd.s32 %v98, 16
    %v115 = vsel %vm107, %v111, %v77
    %v116 = vsel %vm108, %v112, %v84
    %v117 = vsel %vm109, %v113, %v91
    %v118 = vsel %vm110, %v114, %v98
    %vm119 = vcmp.ne.s32.totalorder %v115, 0
    %vm120 = vcmp.ne.s32.totalorder %v116, 0
    %vm121 = vcmp.ne.s32.totalorder %v117, 0
    %vm122 = vcmp.ne.s32.totalorder %v118, 0
    %v123 = vrot.slane %v62, 7
    %v124 = vrot.slane %v63, 7
    %v125 = vrot.slane %v64, 7
    %v126 = vrot.slane %v65, 7
    %vm127 = vcmp.lt.s32.totalorder %v67, 1
    %v128 = vsel %vm127, %v125, %v126
    %v129 = vsel %vm127, %v124, %v125
    %v130 = vsel %vm127, %v123, %v124
    %v131 = vsel %vm127, %v126, %v123
    %v132 = vsel %vm119, %v131, 0.0
    %v133 = vsel %vm120, %v130, 0.0
    %v134 = vsel %vm121, %v129, 0.0
    %v135 = vsel %vm122, %v128, 0.0
    %vm136 = vcmp.ne.s32.totalorder %v115, 15
    %vm137 = vcmp.ne.s32.totalorder %v116, 15
    %vm138 = vcmp.ne.s32.totalorder %v117, 15
    %vm139 = vcmp.ne.s32.totalorder %v118, 15
    %v140 = vrot.slane %v62, 1
    %v141 = vrot.slane %v63, 1
    %v142 = vrot.slane %v64, 1
    %v143 = vrot.slane %v65, 1
    %vm144 = vcmp.lt.s32.totalorder %v67, 7
    %v145 = vsel %vm144, %v142, %v143
    %v146 = vsel %vm144, %v141, %v142
    %v147 = vsel %vm144, %v140, %v141
    %v148 = vsel %vm144, %v143, %v140
    %v149 = vsel %vm136, %v147, 0.0
    %v150 = vsel %vm137, %v146, 0.0
    %v151 = vsel %vm138, %v145, 0.0
    %v152 = vsel %vm139, %v148, 0.0
    %v153 = vld [vmem:[#allocation5] sm:$0xff]
    %v154 = vld [vmem:[#allocation5 + $0x8] sm:$0xff]
    %v155 = vld [vmem:[#allocation5 + $0x10] sm:$0xff]
    %v156 = vld [vmem:[#allocation5 + $0x18] sm:$0xff]
    %v157 = vld [vmem:[#allocation5 + $0x20] sm:$0xff]
    %v158 = vld [vmem:[#allocation5 + $0x28] sm:$0xff]
    %v159 = vld [vmem:[#allocation5 + $0x30] sm:$0xff]
    %v160 = vld [vmem:[#allocation5 + $0x38] sm:$0xff]
    %v161 = vld [vmem:[#allocation5 + $0x40] sm:$0xff]
    %v162 = vld [vmem:[#allocation5 + $0x48] sm:$0xff]
    %v163 = vld [vmem:[#allocation5 + $0x50] sm:$0xff]
    %v164 = vld [vmem:[#allocation5 + $0x58] sm:$0xff]
    %v165 = vld [vmem:[#allocation5 + $0x60] sm:$0xff]
    %v166 = vld [vmem:[#allocation5 + $0x68] sm:$0xff]
    %v167 = vld [vmem:[#allocation5 + $0x70] sm:$0xff]
    %v168 = vld [vmem:[#allocation5 + $0x78] sm:$0xff]
    %v169 = vld [vmem:[#allocation5 + $0x80] sm:$0xff]
    %v170 = vld [vmem:[#allocation5 + $0x88] sm:$0xff]
    %v171 = vld [vmem:[#allocation5 + $0x90] sm:$0xff]
    %v172 = vld [vmem:[#allocation5 + $0x98] sm:$0xff]
    %v173 = vld [vmem:[#allocation5 + $0xa0] sm:$0xff]
    %v174 = vld [vmem:[#allocation5 + $0xa8] sm:$0xff]
    %v175 = vld [vmem:[#allocation5 + $0xb0] sm:$0xff]
    %v176 = vld [vmem:[#allocation5 + $0xb8] sm:$0xff]
    %v177 = vld [vmem:[#allocation5 + $0xc0] sm:$0xff]
    %v178 = vld [vmem:[#allocation5 + $0xc8] sm:$0xff]
    %v179 = vld [vmem:[#allocation5 + $0xd0] sm:$0xff]
    %v180 = vld [vmem:[#allocation5 + $0xd8] sm:$0xff]
    %v181 = vld [vmem:[#allocation5 + $0xe0] sm:$0xff]
    %v182 = vld [vmem:[#allocation5 + $0xe8] sm:$0xff]
    %v183 = vld [vmem:[#allocation5 + $0xf0] sm:$0xff]
    %v184 = vld [vmem:[#allocation5 + $0xf8] sm:$0xff]
    %v185 = vld [vmem:[#allocation5 + $0x100] sm:$0xff]
    %v186 = vld [vmem:[#allocation5 + $0x108] sm:$0xff]
    %v187 = vld [vmem:[#allocation5 + $0x110] sm:$0xff]
    %v188 = vld [vmem:[#allocation5 + $0x118] sm:$0xff]
    %v189 = vld [vmem:[#allocation5 + $0x120] sm:$0xff]
    %v190 = vld [vmem:[#allocation5 + $0x128] sm:$0xff]
    %v191 = vld [vmem:[#allocation5 + $0x130] sm:$0xff]
    %v192 = vld [vmem:[#allocation5 + $0x138] sm:$0xff]
    %v193 = vld [vmem:[#allocation5 + $0x140] sm:$0xff]
    %v194 = vld [vmem:[#allocation5 + $0x148] sm:$0xff]
    %v195 = vld [vmem:[#allocation5 + $0x150] sm:$0xff]
    %v196 = vld [vmem:[#allocation5 + $0x158] sm:$0xff]
    %v197 = vld [vmem:[#allocation5 + $0x160] sm:$0xff]
    %v198 = vld [vmem:[#allocation5 + $0x168] sm:$0xff]
    %v199 = vld [vmem:[#allocation5 + $0x170] sm:$0xff]
    %v200 = vld [vmem:[#allocation5 + $0x178] sm:$0xff]
    %v201 = vld [vmem:[%s2] sm:$0x1]
    %v203 = vlaneseq
    %v204 = vshrl.u32 %v203, 7
    %v205 = vsub.s32 0, %v204
    %v206 = vrot.slane %v201, %v205
    %208 = vmatprep.subr.mxu0 0.0
    %209 = vmatpush1.msra.mxu0 %v153
    %210 = vmatprep.subr.mxu0 0.0
    %211 = vmatpush1.msra.mxu0 %v154
    %212 = vmatprep.subr.mxu0 0.0
    %213 = vmatpush1.msra.mxu0 %v155
    %214 = vmatprep.subr.mxu0 0.0
    %215 = vmatpush1.msra.mxu0 %v156
    %216 = vmatprep.subr.mxu0 0.0
    %217 = vmatpush1.msra.mxu0 %v157
    %218 = vmatprep.subr.mxu0 0.0
    %219 = vmatpush1.msra.mxu0 %v158
    %220 = vmatprep.subr.mxu0 0.0
    %221 = vmatpush1.msra.mxu0 %v159
    %222 = vmatprep.subr.mxu0 0.0
    %223 = vmatpush1.msra.mxu0 %v160
    %224 = vmatprep.subr.mxu0 0.0
    %225 = vmatpush1.msra.mxu0 %v161
    %226 = vmatprep.subr.mxu0 0.0
    %227 = vmatpush1.msra.mxu0 %v162
    %228 = vmatprep.subr.mxu0 0.0
    %229 = vmatpush1.msra.mxu0 %v163
    %230 = vmatprep.subr.mxu0 0.0
    %231 = vmatpush1.msra.mxu0 %v164
    %232 = vmatprep.subr.mxu0 0.0
    %233 = vmatpush1.msra.mxu0 %v165
    %234 = vmatprep.subr.mxu0 0.0
    %235 = vmatpush1.msra.mxu0 %v166
    %236 = vmatprep.subr.mxu0 0.0
    %237 = vmatpush1.msra.mxu0 %v167
    %238 = vmatprep.subr.mxu0 0.0
    %239 = vmatpush1.msra.mxu0 %v168
    %240 = vmatprep.subr.mxu0 0.0
    %241 = vmatpush1.msra.mxu0 %v169
    %242 = vmatprep.subr.mxu0 0.0
    %243 = vmatpush1.msra.mxu0 %v170
    %244 = vmatprep.subr.mxu0 0.0
    %245 = vmatpush1.msra.mxu0 %v171
    %246 = vmatprep.subr.mxu0 0.0
    %247 = vmatpush1.msra.mxu0 %v172
    %248 = vmatprep.subr.mxu0 0.0
    %249 = vmatpush1.msra.mxu0 %v173
    %250 = vmatprep.subr.mxu0 0.0
    %251 = vmatpush1.msra.mxu0 %v174
    %252 = vmatprep.subr.mxu0 0.0
    %253 = vmatpush1.msra.mxu0 %v175
    %254 = vmatprep.subr.mxu0 0.0
    %255 = vmatpush1.msra.mxu0 %v176
    %256 = vmatprep.subr.mxu0 0.0
    %257 = vmatpush1.msra.mxu0 %v177
    %258 = vmatprep.subr.mxu0 0.0
    %259 = vmatpush1.msra.mxu0 %v178
    %260 = vmatprep.subr.mxu0 0.0
    %261 = vmatpush1.msra.mxu0 %v179
    %262 = vmatprep.subr.mxu0 0.0
    %263 = vmatpush1.msra.mxu0 %v180
    %264 = vmatprep.subr.mxu0 0.0
    %265 = vmatpush1.msra.mxu0 %v181
    %266 = vmatprep.subr.mxu0 0.0
    %267 = vmatpush1.msra.mxu0 %v182
    %268 = vmatprep.subr.mxu0 0.0
    %269 = vmatpush1.msra.mxu0 %v183
    %270 = vmatprep.subr.mxu0 0.0
    %271 = vmatpush1.msra.mxu0 %v184
    %272 = vmatprep.mubr.f32.mxu0 %v62
    %273 = vmatmul.mubr.f32.gmra.mrb[0].mxu0 %v132
    %v274 = vpop.f32.mrb[0].mxu0
    %v275 = vadd.f32 %v206, %v274
    %v276 = vpop.f32.mrb[0].mxu0
    %277 = vmatprep.mubr.f32.mxu0 %v63
    %278 = vmatmul.mubr.f32.gmra.mrb[0].mxu0 %v133
    %v279 = vpop.f32.mrb[0].mxu0
    %v280 = vadd.f32 %v206, %v279
    %v281 = vpop.f32.mrb[0].mxu0
    %282 = vmatprep.mubr.f32.mxu0 %v64
    %283 = vmatmul.mubr.f32.gmra.mrb[0].mxu0 %v134
    %v284 = vpop.f32.mrb[0].mxu0
    %v285 = vadd.f32 %v206, %v284
    %v286 = vpop.f32.mrb[0].mxu0
    %287 = vmatprep.mubr.f32.mxu0 %v65
    %288 = vmatmul.mubr.f32.gmra.mrb[0].mxu0 %v135
    %v289 = vpop.f32.mrb[0].mxu0
    %v290 = vadd.f32 %v206, %v289
    %v291 = vpop.f32.mrb[0].mxu0
    %292 = vdwg.mxu0
    %293 = vmatprep.subr.mxu0 0.0
    %294 = vmatpush1.msra.mxu0 %v185
    %295 = vmatprep.subr.mxu0 0.0
    %296 = vmatpush1.msra.mxu0 %v186
    %297 = vmatprep.subr.mxu0 0.0
    %298 = vmatpush1.msra.mxu0 %v187
    %299 = vmatprep.subr.mxu0 0.0
    %300 = vmatpush1.msra.mxu0 %v188
    %301 = vmatprep.subr.mxu0 0.0
    %302 = vmatpush1.msra.mxu0 %v189
    %303 = vmatprep.subr.mxu0 0.0
    %304 = vmatpush1.msra.mxu0 %v190
    %305 = vmatprep.subr.mxu0 0.0
    %306 = vmatpush1.msra.mxu0 %v191
    %307 = vmatprep.subr.mxu0 0.0
    %308 = vmatpush1.msra.mxu0 %v192
    %309 = vmatprep.subr.mxu0 0.0
    %310 = vmatpush1.msra.mxu0 %v193
    %311 = vmatprep.subr.mxu0 0.0
    %312 = vmatpush1.msra.mxu0 %v194
    %313 = vmatprep.subr.mxu0 0.0
    %314 = vmatpush1.msra.mxu0 %v195
    %315 = vmatprep.subr.mxu0 0.0
    %316 = vmatpush1.msra.mxu0 %v196
    %317 = vmatprep.subr.mxu0 0.0
    %318 = vmatpush1.msra.mxu0 %v197
    %319 = vmatprep.subr.mxu0 0.0
    %320 = vmatpush1.msra.mxu0 %v198
    %321 = vmatprep.subr.mxu0 0.0
    %322 = vmatpush1.msra.mxu0 %v199
    %323 = vmatprep.subr.mxu0 0.0
    %324 = vmatpush1.msra.mxu0 %v200
    %325 = vmatprep.subr.mxu0 0.0
    %326 = vmatpush1.msra.mxu0 0.0
    %327 = vmatprep.subr.mxu0 0.0
    %328 = vmatpush1.msra.mxu0 0.0
    %329 = vmatprep.subr.mxu0 0.0
    %330 = vmatpush1.msra.mxu0 0.0
    %331 = vmatprep.subr.mxu0 0.0
    %332 = vmatpush1.msra.mxu0 0.0
    %333 = vmatprep.subr.mxu0 0.0
    %334 = vmatpush1.msra.mxu0 0.0
    %335 = vmatprep.subr.mxu0 0.0
    %336 = vmatpush1.msra.mxu0 0.0
    %337 = vmatprep.subr.mxu0 0.0
    %338 = vmatpush1.msra.mxu0 0.0
    %339 = vmatprep.subr.mxu0 0.0
    %340 = vmatpush1.msra.mxu0 0.0
    %341 = vmatprep.subr.mxu0 0.0
    %342 = vmatpush1.msra.mxu0 0.0
    %343 = vmatprep.subr.mxu0 0.0
    %344 = vmatpush1.msra.mxu0 0.0
    %345 = vmatprep.subr.mxu0 0.0
    %346 = vmatpush1.msra.mxu0 0.0
    %347 = vmatprep.subr.mxu0 0.0
    %348 = vmatpush1.msra.mxu0 0.0
    %349 = vmatprep.subr.mxu0 0.0
    %350 = vmatpush1.msra.mxu0 0.0
    %351 = vmatprep.subr.mxu0 0.0
    %352 = vmatpush1.msra.mxu0 0.0
    %353 = vmatprep.subr.mxu0 0.0
    %354 = vmatpush1.msra.mxu0 0.0
    %355 = vmatprep.subr.mxu0 0.0
    %356 = vmatpush1.msra.mxu0 0.0
    %357 = vmatprep.mubr.f32.mxu0 0.0
    %358 = vmatmul.mubr.f32.gmra.mrb[0].mxu0 %v149
    %v359 = vpop.f32.mrb[0].mxu0
    %v360 = vadd.f32 %v275, %v359
    %v361 = vpop.f32.mrb[0].mxu0
    %362 = vmatprep.mubr.f32.mxu0 0.0
    %363 = vmatmul.mubr.f32.gmra.mrb[0].mxu0 %v150
    %v364 = vpop.f32.mrb[0].mxu0
    %v365 = vadd.f32 %v280, %v364
    %v366 = vpop.f32.mrb[0].mxu0
    %367 = vmatprep.mubr.f32.mxu0 0.0
    %368 = vmatmul.mubr.f32.gmra.mrb[0].mxu0 %v151
    %v369 = vpop.f32.mrb[0].mxu0
    %v370 = vadd.f32 %v285, %v369
    %v371 = vpop.f32.mrb[0].mxu0
    %372 = vmatprep.mubr.f32.mxu0 0.0
    %373 = vmatmul.mubr.f32.gmra.mrb[0].mxu0 %v152
    %v374 = vpop.f32.mrb[0].mxu0
    %v375 = vadd.f32 %v290, %v374
    %v376 = vpop.f32.mrb[0].mxu0
    %377 = vdwg.mxu0
    %v378 = vmax.f32 %v360, 0.0
    %v379 = vmax.f32 %v365, 0.0
    %v380 = vmax.f32 %v370, 0.0
    %v381 = vmax.f32 %v375, 0.0
    %v382 = vrot.slane %v378, 7
    %v383 = vrot.slane %v379, 7
    %v384 = vrot.slane %v380, 7
    %v385 = vrot.slane %v381, 7
    %v386 = vsel %vm127, %v384, %v385
    %v387 = vsel %vm127, %v383, %v384
    %v388 = vsel %vm127, %v382, %v383
    %v389 = vsel %vm127, %v385, %v382
    %v390 = vsel %vm119, %v389, 0.0
    %v391 = vsel %vm120, %v388, 0.0
    %v392 = vsel %vm121, %v387, 0.0
    %v393 = vsel %vm122, %v386, 0.0
    %v394 = vrot.slane %v378, 1
    %v395 = vrot.slane %v379, 1
    %v396 = vrot.slane %v380, 1
    %v397 = vrot.slane %v381, 1
    %v398 = vsel %vm144, %v396, %v397
    %v399 = vsel %vm144, %v395, %v396
    %v400 = vsel %vm144, %v394, %v395
    %v401 = vsel %vm144, %v397, %v394
    %v402 = vsel %vm136, %v400, 0.0
    %v403 = vsel %vm137, %v399, 0.0
    %v404 = vsel %vm138, %v398, 0.0
    %v405 = vsel %vm139, %v401, 0.0
    %v406 = vld [vmem:[#allocation7] sm:$0xff]
    %v407 = vld [vmem:[#allocation7 + $0x8] sm:$0xff]
    %v408 = vld [vmem:[#allocation7 + $0x10] sm:$0xff]
    %v409 = vld [vmem:[#allocation7 + $0x18] sm:$0xff]
    %v410 = vld [vmem:[#allocation7 + $0x20] sm:$0xff]
    %v411 = vld [vmem:[#allocation7 + $0x28] sm:$0xff]
    %v412 = vld [vmem:[#allocation7 + $0x30] sm:$0xff]
    %v413 = vld [vmem:[#allocation7 + $0x38] sm:$0xff]
    %v414 = vld [vmem:[#allocation7 + $0x40] sm:$0xff]
    %v415 = vld [vmem:[#allocation7 + $0x48] sm:$0xff]
    %v416 = vld [vmem:[#allocation7 + $0x50] sm:$0xff]
    %v417 = vld [vmem:[#allocation7 + $0x58] sm:$0xff]
    %v418 = vld [vmem:[#allocation7 + $0x60] sm:$0xff]
    %v419 = vld [vmem:[#allocation7 + $0x68] sm:$0xff]
    %v420 = vld [vmem:[#allocation7 + $0x70] sm:$0xff]
    %v421 = vld [vmem:[#allocation7 + $0x78] sm:$0xff]
    %v422 = vld [vmem:[#allocation7 + $0x80] sm:$0xff]
    %v423 = vld [vmem:[#allocation7 + $0x88] sm:$0xff]
    %v424 = vld [vmem:[#allocation7 + $0x90] sm:$0xff]
    %v425 = vld [vmem:[#allocation7 + $0x98] sm:$0xff]
    %v426 = vld [vmem:[#allocation7 + $0xa0] sm:$0xff]
    %v427 = vld [vmem:[#allocation7 + $0xa8] sm:$0xff]
    %v428 = vld [vmem:[#allocation7 + $0xb0] sm:$0xff]
    %v429 = vld [vmem:[#allocation7 + $0xb8] sm:$0xff]
    %v430 = vld [vmem:[#allocation7 + $0xc0] sm:$0xff]
    %v431 = vld [vmem:[#allocation7 + $0xc8] sm:$0xff]
    %v432 = vld [vmem:[#allocation7 + $0xd0] sm:$0xff]
    %v433 = vld [vmem:[#allocation7 + $0xd8] sm:$0xff]
    %v434 = vld [vmem:[#allocation7 + $0xe0] sm:$0xff]
    %v435 = vld [vmem:[#allocation7 + $0xe8] sm:$0xff]
    %v436 = vld [vmem:[#allocation7 + $0xf0] sm:$0xff]
    %v437 = vld [vmem:[#allocation7 + $0xf8] sm:$0xff]
    %v438 = vld [vmem:[#allocation7 + $0x100] sm:$0xff]
    %v439 = vld [vmem:[#allocation7 + $0x108] sm:$0xff]
    %v440 = vld [vmem:[#allocation7 + $0x110] sm:$0xff]
    %v441 = vld [vmem:[#allocation7 + $0x118] sm:$0xff]
    %v442 = vld [vmem:[#allocation7 + $0x120] sm:$0xff]
    %v443 = vld [vmem:[#allocation7 + $0x128] sm:$0xff]
    %v444 = vld [vmem:[#allocation7 + $0x130] sm:$0xff]
    %v445 = vld [vmem:[#allocation7 + $0x138] sm:$0xff]
    %v446 = vld [vmem:[#allocation7 + $0x140] sm:$0xff]
    %v447 = vld [vmem:[#allocation7 + $0x148] sm:$0xff]
    %v448 = vld [vmem:[#allocation7 + $0x150] sm:$0xff]
    %v449 = vld [vmem:[#allocation7 + $0x158] sm:$0xff]
    %v450 = vld [vmem:[#allocation7 + $0x160] sm:$0xff]
    %v451 = vld [vmem:[#allocation7 + $0x168] sm:$0xff]
    %v452 = vld [vmem:[#allocation7 + $0x170] sm:$0xff]
    %v453 = vld [vmem:[#allocation7 + $0x178] sm:$0xff]
    %v454 = vld [vmem:[%s4] sm:$0x1]
    %v456 = vlaneseq
    %v457 = vshrl.u32 %v456, 7
    %v458 = vsub.s32 0, %v457
    %v459 = vrot.slane %v454, %v458
    %461 = vmatprep.subr.mxu0 0.0
    %462 = vmatpush1.msra.mxu0 %v406
    %463 = vmatprep.subr.mxu0 0.0
    %464 = vmatpush1.msra.mxu0 %v407
    %465 = vmatprep.subr.mxu0 0.0
    %466 = vmatpush1.msra.mxu0 %v408
    %467 = vmatprep.subr.mxu0 0.0
    %468 = vmatpush1.msra.mxu0 %v409
    %469 = vmatprep.subr.mxu0 0.0
    %470 = vmatpush1.msra.mxu0 %v410
    %471 = vmatprep.subr.mxu0 0.0
    %472 = vmatpush1.msra.mxu0 %v411
    %473 = vmatprep.subr.mxu0 0.0
    %474 = vmatpush1.msra.mxu0 %v412
    %475 = vmatprep.subr.mxu0 0.0
    %476 = vmatpush1.msra.mxu0 %v413
    %477 = vmatprep.subr.mxu0 0.0
    %478 = vmatpush1.msra.mxu0 %v414
    %479 = vmatprep.subr.mxu0 0.0
    %480 = vmatpush1.msra.mxu0 %v415
    %481 = vmatprep.subr.mxu0 0.0
    %482 = vmatpush1.msra.mxu0 %v416
    %483 = vmatprep.subr.mxu0 0.0
    %484 = vmatpush1.msra.mxu0 %v417
    %485 = vmatprep.subr.mxu0 0.0
    %486 = vmatpush1.msra.mxu0 %v418
    %487 = vmatprep.subr.mxu0 0.0
    %488 = vmatpush1.msra.mxu0 %v419
    %489 = vmatprep.subr.mxu0 0.0
    %490 = vmatpush1.msra.mxu0 %v420
    %491 = vmatprep.subr.mxu0 0.0
    %492 = vmatpush1.msra.mxu0 %v421
    %493 = vmatprep.subr.mxu0 0.0
    %494 = vmatpush1.msra.mxu0 %v422
    %495 = vmatprep.subr.mxu0 0.0
    %496 = vmatpush1.msra.mxu0 %v423
    %497 = vmatprep.subr.mxu0 0.0
    %498 = vmatpush1.msra.mxu0 %v424
    %499 = vmatprep.subr.mxu0 0.0
    %500 = vmatpush1.msra.mxu0 %v425
    %501 = vmatprep.subr.mxu0 0.0
    %502 = vmatpush1.msra.mxu0 %v426
    %503 = vmatprep.subr.mxu0 0.0
    %504 = vmatpush1.msra.mxu0 %v427
    %505 = vmatprep.subr.mxu0 0.0
    %506 = vmatpush1.msra.mxu0 %v428
    %507 = vmatprep.subr.mxu0 0.0
    %508 = vmatpush1.msra.mxu0 %v429
    %509 = vmatprep.subr.mxu0 0.0
    %510 = vmatpush1.msra.mxu0 %v430
    %511 = vmatprep.subr.mxu0 0.0
    %512 = vmatpush1.msra.mxu0 %v431
    %513 = vmatprep.subr.mxu0 0.0
    %514 = vmatpush1.msra.mxu0 %v432
    %515 = vmatprep.subr.mxu0 0.0
    %516 = vmatpush1.msra.mxu0 %v433
    %517 = vmatprep.subr.mxu0 0.0
    %518 = vmatpush1.msra.mxu0 %v434
    %519 = vmatprep.subr.mxu0 0.0
    %520 = vmatpush1.msra.mxu0 %v435
    %521 = vmatprep.subr.mxu0 0.0
    %522 = vmatpush1.msra.mxu0 %v436
    %523 = vmatprep.subr.mxu0 0.0
    %524 = vmatpush1.msra.mxu0 %v437
    %525 = vmatprep.mubr.f32.mxu0 %v378
    %526 = vmatmul.mubr.f32.gmra.mrb[0].mxu0 %v390
    %v527 = vpop.f32.mrb[0].mxu0
    %v528 = vadd.f32 %v459, %v527
    %v529 = vpop.f32.mrb[0].mxu0
    %530 = vmatprep.mubr.f32.mxu0 %v379
    %531 = vmatmul.mubr.f32.gmra.mrb[0].mxu0 %v391
    %v532 = vpop.f32.mrb[0].mxu0
    %v533 = vadd.f32 %v459, %v532
    %v534 = vpop.f32.mrb[0].mxu0
    %535 = vmatprep.mubr.f32.mxu0 %v380
    %536 = vmatmul.mubr.f32.gmra.mrb[0].mxu0 %v392
    %v537 = vpop.f32.mrb[0].mxu0
    %v538 = vadd.f32 %v459, %v537
    %v539 = vpop.f32.mrb[0].mxu0
    %540 = vmatprep.mubr.f32.mxu0 %v381
    %541 = vmatmul.mubr.f32.gmra.mrb[0].mxu0 %v393
    %v542 = vpop.f32.mrb[0].mxu0
    %v543 = vadd.f32 %v459, %v542
    %v544 = vpop.f32.mrb[0].mxu0
    %545 = vdwg.mxu0
    %546 = vmatprep.subr.mxu0 0.0
    %547 = vmatpush1.msra.mxu0 %v438
    %548 = vmatprep.subr.mxu0 0.0
    %549 = vmatpush1.msra.mxu0 %v439
    %550 = vmatprep.subr.mxu0 0.0
    %551 = vmatpush1.msra.mxu0 %v440
    %552 = vmatprep.subr.mxu0 0.0
    %553 = vmatpush1.msra.mxu0 %v441
    %554 = vmatprep.subr.mxu0 0.0
    %555 = vmatpush1.msra.mxu0 %v442
    %556 = vmatprep.subr.mxu0 0.0
    %557 = vmatpush1.msra.mxu0 %v443
    %558 = vmatprep.subr.mxu0 0.0
    %559 = vmatpush1.msra.mxu0 %v444
    %560 = vmatprep.subr.mxu0 0.0
    %561 = vmatpush1.msra.mxu0 %v445
    %562 = vmatprep.subr.mxu0 0.0
    %563 = vmatpush1.msra.mxu0 %v446
    %564 = vmatprep.subr.mxu0 0.0
    %565 = vmatpush1.msra.mxu0 %v447
    %566 = vmatprep.subr.mxu0 0.0
    %567 = vmatpush1.msra.mxu0 %v448
    %568 = vmatprep.subr.mxu0 0.0
    %569 = vmatpush1.msra.mxu0 %v449
    %570 = vmatprep.subr.mxu0 0.0
    %571 = vmatpush1.msra.mxu0 %v450
    %572 = vmatprep.subr.mxu0 0.0
    %573 = vmatpush1.msra.mxu0 %v451
    %574 = vmatprep.subr.mxu0 0.0
    %575 = vmatpush1.msra.mxu0 %v452
    %576 = vmatprep.subr.mxu0 0.0
    %577 = vmatpush1.msra.mxu0 %v453
    %578 = vmatprep.subr.mxu0 0.0
    %579 = vmatpush1.msra.mxu0 0.0
    %580 = vmatprep.subr.mxu0 0.0
    %581 = vmatpush1.msra.mxu0 0.0
    %582 = vmatprep.subr.mxu0 0.0
    %583 = vmatpush1.msra.mxu0 0.0
    %584 = vmatprep.subr.mxu0 0.0
    %585 = vmatpush1.msra.mxu0 0.0
    %586 = vmatprep.subr.mxu0 0.0
    %587 = vmatpush1.msra.mxu0 0.0
    %588 = vmatprep.subr.mxu0 0.0
    %589 = vmatpush1.msra.mxu0 0.0
    %590 = vmatprep.subr.mxu0 0.0
    %591 = vmatpush1.msra.mxu0 0.0
    %592 = vmatprep.subr.mxu0 0.0
    %593 = vmatpush1.msra.mxu0 0.0
    %594 = vmatprep.subr.mxu0 0.0
    %595 = vmatpush1.msra.mxu0 0.0
    %596 = vmatprep.subr.mxu0 0.0
    %597 = vmatpush1.msra.mxu0 0.0
    %598 = vmatprep.subr.mxu0 0.0
    %599 = vmatpush1.msra.mxu0 0.0
    %600 = vmatprep.subr.mxu0 0.0
    %601 = vmatpush1.msra.mxu0 0.0
    %602 = vmatprep.subr.mxu0 0.0
    %603 = vmatpush1.msra.mxu0 0.0
    %604 = vmatprep.subr.mxu0 0.0
    %605 = vmatpush1.msra.mxu0 0.0
    %606 = vmatprep.subr.mxu0 0.0
    %607 = vmatpush1.msra.mxu0 0.0
    %608 = vmatprep.subr.mxu0 0.0
    %609 = vmatpush1.msra.mxu0 0.0
    %610 = vmatprep.mubr.f32.mxu0 0.0
    %611 = vmatmul.mubr.f32.gmra.mrb[0].mxu0 %v402
    %v612 = vpop.f32.mrb[0].mxu0
    %v613 = vadd.f32 %v528, %v612
    %v614 = vpop.f32.mrb[0].mxu0
    %615 = vmatprep.mubr.f32.mxu0 0.0
    %616 = vmatmul.mubr.f32.gmra.mrb[0].mxu0 %v403
    %v617 = vpop.f32.mrb[0].mxu0
    %v618 = vadd.f32 %v533, %v617
    %v619 = vpop.f32.mrb[0].mxu0
    %620 = vmatprep.mubr.f32.mxu0 0.0
    %621 = vmatmul.mubr.f32.gmra.mrb[0].mxu0 %v404
    %v622 = vpop.f32.mrb[0].mxu0
    %v623 = vadd.f32 %v538, %v622
    %v624 = vpop.f32.mrb[0].mxu0
    %625 = vmatprep.mubr.f32.mxu0 0.0
    %626 = vmatmul.mubr.f32.gmra.mrb[0].mxu0 %v405
    %v627 = vpop.f32.mrb[0].mxu0
    %v628 = vadd.f32 %v543, %v627
    %v629 = vpop.f32.mrb[0].mxu0
    %630 = vdwg.mxu0
    %v631 = vmax.f32 %v613, 0.0
    %v632 = vmax.f32 %v618, 0.0
    %v633 = vmax.f32 %v623, 0.0
    %v634 = vmax.f32 %v628, 0.0
    %635 = vst [vmem:[#allocation8] sm:$0xff] %v631
    %636 = vst [vmem:[#allocation8 + $0x8] sm:$0xff] %v632
    %637 = vst [vmem:[#allocation8 + $0x10] sm:$0xff] %v633
    %638 = vst [vmem:[#allocation8 + $0x18] sm:$0xff] %v634
    // Predicated region
    $region34: #{tpu_custom_call.1} parent=1 // pred_check
      _
    $region35: #{tpu_custom_call.1} parent=1 // pred_check_branch
      %640 = sbr.rel (0) target = $region37
    $region36: #{tpu_custom_call.1} parent=1 // pred_region
      %s642 = ssub.s32 512, 512
      %643 = vsyncadd [#allocation4], %s642
      %s644 = sshll.u32 [#allocation8], 4
      %s645 = int_to_ptr.vmem [resolvable:$true] %s644
      %650 = dma.vmem_to_hbm [thread:$0]  %s645, 512, %s5, [#allocation4], 128, 128, 8
    $region37: #{tpu_custom_call.1} parent=1 // pred_fallthru
      _
    // Predicated region
    $region38: #{tpu_custom_call.1} parent=1 // pred_check
      _
    $region39: #{tpu_custom_call.1} parent=1 // pred_check_branch
      %652 = sbr.rel (0) target = $region41
    $region40: #{tpu_custom_call.1} parent=1 // pred_region
      %653 = dma.done [#allocation4], 512
    $region41: #{tpu_custom_call.1} parent=1 // pred_fallthru
      _
    %654 = vsyncpa [#allocation3], 1
    %655 = vsyncpa [#allocation6], 1
    %656 = vsyncpa [#allocation4], 1

</llo_original>
